<compile_context>
chip_gen: v7x
topology: tpu7x:2x2x1
jax: 0.10.0
libtpu: 0.0.40
codegen_flags: <defaults>
</compile_context>

<pallas_src>
import jax
import jax.numpy as jnp
from jax.experimental import pallas as pl
from jax.experimental.pallas import tpu as pltpu

PAD_TOKEN_ID = 0  # data.PAD_TOKEN_ID


def _round_up(x, m):
    return (x + m - 1) // m * m


# ----------------------------- Pallas kernel ------------------------------- #
def dan_kernel(x_ref, inv_ref, w1_ref, b1_ref, w2_ref, b2_ref, w3_ref, b3_ref,
               out_ref, acc_ref):
    """Fused masked-average pooling (over the seq grid axis) + 3-layer tanh MLP.

    x_ref   : (TB, TS, E_pad) bf16  embedded tokens (PAD rows are exactly zero)
    inv_ref : (TB, 1)         f32   1 / (# non-PAD tokens), precomputed in XLA
    w*_ref  : (n_in, H_pad)   f32   Linear weights (transposed, lane-padded)
    b*_ref  : (1, H_pad)      f32   Linear biases (lane-padded)
    out_ref : (TB, H_pad)     f32
    acc_ref : (TB, E_pad)     f32   VMEM scratch, pooled-sum accumulator
    """
    s = pl.program_id(1)

    @pl.when(s == 0)
    def _():
        acc_ref[...] = jnp.zeros_like(acc_ref)

    # PAD rows embed to exactly zero, so the plain sum is the masked numerator.
    acc_ref[...] += jnp.sum(x_ref[...].astype(jnp.float32), axis=1)

    @pl.when(s == pl.num_programs(1) - 1)
    def _():
        avg = acc_ref[...] * inv_ref[...]                          # (TB, E_pad)
        # 3 x (Linear -> Tanh); dropout=0.0 is identity.
        h = jnp.tanh(jnp.dot(avg, w1_ref[...],
                             preferred_element_type=jnp.float32) + b1_ref[...])
        h = jnp.tanh(jnp.dot(h, w2_ref[...],
                             preferred_element_type=jnp.float32) + b2_ref[...])
        out_ref[...] = jnp.tanh(jnp.dot(h, w3_ref[...],
                                        preferred_element_type=jnp.float32)
                                + b3_ref[...])


# ------------------------------ tower wrapper ------------------------------- #
def dan_tower(tokens, emb_table, mlp_params, *, tile_b=128, tile_s=512):
    """One DAN tower: embedding lookup (XLA gather) + gridded pool/MLP kernel."""
    B, S = tokens.shape
    E = emb_table.shape[1]
    w1, b1, w2, b2, w3, b3 = mlp_params
    H = w3.shape[1]

    E_pad = _round_up(E, 128)
    H_pad = _round_up(H, 128)
    tile_b = min(tile_b, _round_up(B, 8))          # multiple of 8 (f32 sublane)
    tile_s = min(tile_s, _round_up(S, 8))
    B_pad = _round_up(B, tile_b)
    S_pad = _round_up(S, tile_s)

    # Pad tokens with PAD (zero embedding row -> no effect on the pooled sum).
    toks = jnp.pad(tokens, ((0, B_pad - B), (0, S_pad - S)),
                   constant_values=PAD_TOKEN_ID)

    # Embedding gather stays in XLA (data-dependent row gather); bf16 activations.
    emb = jnp.take(emb_table, toks, axis=0)                 # (B_pad, S_pad, E)
    emb = jnp.pad(emb, ((0, 0), (0, 0), (0, E_pad - E)))    # lane-pad E

    # Inverse non-PAD count (original 1/denom semantics for real rows, i.e.
    # an all-PAD row still gives inf/NaN like PyTorch; padded rows get 0 and
    # are sliced off below).
    cnt = jnp.sum(tokens != PAD_TOKEN_ID, axis=1).astype(jnp.float32)
    inv = jnp.pad((1.0 / cnt)[:, None], ((0, B_pad - B), (0, 0)))

    # Zero lane-padding of the MLP params: padded rows/cols contribute tanh(0)=0
    # in the padded output columns, which are discarded.
    w1p = jnp.pad(w1, ((0, E_pad - E), (0, H_pad - H)))
    w2p = jnp.pad(w2, ((0, H_pad - H), (0, H_pad - H)))
    w3p = jnp.pad(w3, ((0, H_pad - H), (0, H_pad - H)))
    b1p = jnp.pad(b1, ((0, 0), (0, H_pad - H)))
    b2p = jnp.pad(b2, ((0, 0), (0, H_pad - H)))
    b3p = jnp.pad(b3, ((0, 0), (0, H_pad - H)))

    # Weights/biases: whole-array blocks with constant index maps -> resident
    # in VMEM across the whole grid (no re-DMA per step).
    const2d = lambda shape: pl.BlockSpec(shape, lambda b, s: (0, 0))

    out = pl.pallas_call(
        dan_kernel,
        out_shape=jax.ShapeDtypeStruct((B_pad, H_pad), jnp.float32),
        grid=(B_pad // tile_b, S_pad // tile_s),
        in_specs=[
            pl.BlockSpec((tile_b, tile_s, E_pad), lambda b, s: (b, s, 0)),
            pl.BlockSpec((tile_b, 1), lambda b, s: (b, 0)),
            const2d((E_pad, H_pad)), const2d((1, H_pad)),
            const2d((H_pad, H_pad)), const2d((1, H_pad)),
            const2d((H_pad, H_pad)), const2d((1, H_pad)),
        ],
        out_specs=pl.BlockSpec((tile_b, H_pad), lambda b, s: (b, 0)),
        scratch_shapes=[pltpu.VMEM((tile_b, E_pad), jnp.float32)],
        compiler_params=pltpu.CompilerParams(
            dimension_semantics=("parallel", "arbitrary"),
            vmem_limit_bytes=32 * 1024 * 1024),
    )(emb, inv, w1p, b1p, w2p, b2p, w3p, b3p)

    return out[:B, :H]


# ------------------------------ model glue --------------------------------- #
def dan_model_forward(params, code, nl, fake_code):
    """Equivalent of DANModel.forward(code, nl, fake_code)."""
    B = code.shape[0]
    # code and fake_code share code_embeddings + code_nn -> one kernel call.
    code_stacked = jnp.concatenate([code, fake_code], axis=0)        # (2B, S)
    code_both = dan_tower(code_stacked, params["code_emb"], params["code_nn"])
    nl_emb = dan_tower(nl, params["nl_emb"], params["nl_nn"])
    return code_both[:B], nl_emb, code_both[B:]


# ----------------------- deterministic parameter init ---------------------- #
def make_mlp_params(key, emb_size, hidden_size, num_layers=3):
    """nn.Linear-style init; weights stored transposed (n_in, n_out), f32."""
    keys = jax.random.split(key, 2 * num_layers)
    params = []
    for i in range(num_layers):
        n_in = emb_size if i == 0 else hidden_size
        n_out = hidden_size
        s = float(n_in) ** -0.5
        w = jax.random.uniform(keys[2 * i], (n_in, n_out), jnp.float32, -s, s)
        b = jax.random.uniform(keys[2 * i + 1], (1, n_out), jnp.float32, -s, s)
        params += [w, b]
    return tuple(params)


def init_params(key, code_vocab, nl_vocab, emb_size, hidden_size, num_layers=3):
    k_ce, k_ne, k_cn, k_nn = jax.random.split(key, 4)
    code_emb = jax.random.normal(k_ce, (code_vocab, emb_size), jnp.float32)
    nl_emb = jax.random.normal(k_ne, (nl_vocab, emb_size), jnp.float32)
    # padding_idx row must be exactly zero (the kernel relies on it).
    code_emb = code_emb.at[PAD_TOKEN_ID].set(0.0).astype(jnp.bfloat16)
    nl_emb = nl_emb.at[PAD_TOKEN_ID].set(0.0).astype(jnp.bfloat16)
    return {
        "code_emb": code_emb,
        "nl_emb": nl_emb,
        "code_nn": make_mlp_params(k_cn, emb_size, hidden_size, num_layers),
        "nl_nn": make_mlp_params(k_nn, emb_size, hidden_size, num_layers),
    }


# ------------------------------- reference --------------------------------- #
def ref_tower(tokens, emb_table, mlp_params):
    emb = jnp.take(emb_table.astype(jnp.float32), tokens, axis=0)
    m = (tokens != PAD_TOKEN_ID).astype(jnp.float32)
    num = jnp.sum(emb * m[:, :, None], axis=1)
    denom = jnp.sum(m, axis=1, keepdims=True)
    h = num / denom
    w1, b1, w2, b2, w3, b3 = mlp_params
    h = jnp.tanh(h @ w1 + b1)
    h = jnp.tanh(h @ w2 + b2)
    return jnp.tanh(h @ w3 + b3)


def ref_forward(params, code, nl, fake_code):
    return (ref_tower(code, params["code_emb"], params["code_nn"]),
            ref_tower(nl, params["nl_emb"], params["nl_nn"]),
            ref_tower(fake_code, params["code_emb"], params["code_nn"]))


# ---------------------------------- main ------------------------------------ #
if __name__ == "__main__":
    B, S = 2, 8
    EMB, HID = 16, 32
    CODE_VOCAB, NL_VOCAB = 50, 40
    MARGIN = 0.5  # unused in forward()

    key = jax.random.PRNGKey(0)
    kp, kc, kn, kf = jax.random.split(key, 4)
    params = init_params(kp, CODE_VOCAB, NL_VOCAB, EMB, HID)

    def make_tokens(k, vocab, lens):
        toks = jax.random.randint(k, (B, S), 1, vocab, dtype=jnp.int32)
        pos = jnp.arange(S)[None, :]
        return jnp.where(pos < jnp.asarray(lens)[:, None], toks, PAD_TOKEN_ID)

    code = make_tokens(kc, CODE_VOCAB, [8, 5])
    nl = make_tokens(kn, NL_VOCAB, [6, 8])
    fake_code = make_tokens(kf, CODE_VOCAB, [7, 4])

    fwd = jax.jit(dan_model_forward)
    code_emb, nl_emb, fake_emb = jax.block_until_ready(
        fwd(params, code, nl, fake_code))

    # sanity check against a pure-JAX reference (same bf16 embedding tables)
    ref_code, ref_nl, ref_fake = ref_forward(params, code, nl, fake_code)
    assert jnp.allclose(code_emb, ref_code, atol=1e-3, rtol=1e-3)
    assert jnp.allclose(nl_emb, ref_nl, atol=1e-3, rtol=1e-3)
    assert jnp.allclose(fake_emb, ref_fake, atol=1e-3, rtol=1e-3)

    print("KERNEL_OK")
</pallas_src>

<mosaic_0001>
module attributes {stable_mosaic.version = 11 : i64} {
  func.func @dan_kernel(%arg0: i32, %arg1: i32, %arg2: memref<8x8x128xbf16, #tpu.memory_space<vmem>>, %arg3: memref<8x1xf32, #tpu.memory_space<vmem>>, %arg4: memref<128x128xf32, #tpu.memory_space<vmem>>, %arg5: memref<1x128xf32, #tpu.memory_space<vmem>>, %arg6: memref<128x128xf32, #tpu.memory_space<vmem>>, %arg7: memref<1x128xf32, #tpu.memory_space<vmem>>, %arg8: memref<128x128xf32, #tpu.memory_space<vmem>>, %arg9: memref<1x128xf32, #tpu.memory_space<vmem>>, %arg10: memref<8x128xf32, #tpu.memory_space<vmem>>, %arg11: memref<8x128xf32, #tpu.memory_space<vmem>>) attributes {dimension_semantics = [#tpu.dimension_semantics<parallel>, #tpu.dimension_semantics<arbitrary>], iteration_bounds = array<i64: 1, 1>, scalar_prefetch = 0 : i64, scratch_operands = 1 : i64, tpu.core_type = #tpu.core_type<tc>, window_params = [{transform_indices = @transform_0, window_bounds = array<i64: 8, 8, 128>}, {transform_indices = @transform_1, window_bounds = array<i64: 8, 1>}, {pipeline_mode = #tpu.pipeline_mode<synchronous>, transform_indices = @transform_2, window_bounds = array<i64: 128, 128>}, {pipeline_mode = #tpu.pipeline_mode<synchronous>, transform_indices = @transform_3, window_bounds = array<i64: 1, 128>}, {pipeline_mode = #tpu.pipeline_mode<synchronous>, transform_indices = @transform_4, window_bounds = array<i64: 128, 128>}, {pipeline_mode = #tpu.pipeline_mode<synchronous>, transform_indices = @transform_5, window_bounds = array<i64: 1, 128>}, {pipeline_mode = #tpu.pipeline_mode<synchronous>, transform_indices = @transform_6, window_bounds = array<i64: 128, 128>}, {pipeline_mode = #tpu.pipeline_mode<synchronous>, transform_indices = @transform_7, window_bounds = array<i64: 1, 128>}, {transform_indices = @transform_8, window_bounds = array<i64: 8, 128>}]} {
    %c0_i32 = arith.constant 0 : i32
    %0 = arith.cmpi eq, %arg1, %c0_i32 : i32
    %1 = arith.extui %0 : i1 to i32
    %c0_i32_0 = arith.constant 0 : i32
    %2 = arith.cmpi ne, %1, %c0_i32_0 : i32
    scf.if %2 {
      %cst_9 = arith.constant 0.000000e+00 : f32
      %12 = vector.broadcast %cst_9 : f32 to vector<8x128xf32>
      %c0_10 = arith.constant 0 : index
      %c0_11 = arith.constant 0 : index
      %13 = vector.load %arg11[%c0_10, %c0_11] : memref<8x128xf32, #tpu.memory_space<vmem>>, vector<8x128xf32>
      tpu.vector_store %arg11[%c0_10, %c0_11], %12 {strides = array<i32>} : memref<8x128xf32, #tpu.memory_space<vmem>>, vector<8x128xf32>,
    } else {
    }
    %c0 = arith.constant 0 : index
    %c0_1 = arith.constant 0 : index
    %3 = vector.load %arg11[%c0, %c0_1] : memref<8x128xf32, #tpu.memory_space<vmem>>, vector<8x128xf32>
    %c0_2 = arith.constant 0 : index
    %c0_3 = arith.constant 0 : index
    %c0_4 = arith.constant 0 : index
    %4 = vector.load %arg2[%c0_2, %c0_3, %c0_4] : memref<8x8x128xbf16, #tpu.memory_space<vmem>>, vector<8x8x128xbf16>
    %5 = arith.extf %4 : vector<8x8x128xbf16> to vector<8x8x128xf32>
    %cst = arith.constant dense<0.000000e+00> : vector<8x128xf32>
    %6 = vector.multi_reduction <add>, %5, %cst [1] : vector<8x8x128xf32> to vector<8x128xf32>
    %7 = arith.addf %3, %6 : vector<8x128xf32>
    %c0_5 = arith.constant 0 : index
    %c0_6 = arith.constant 0 : index
    %8 = vector.load %arg11[%c0_5, %c0_6] : memref<8x128xf32, #tpu.memory_space<vmem>>, vector<8x128xf32>
    tpu.vector_store %arg11[%c0_5, %c0_6], %7 {strides = array<i32>} : memref<8x128xf32, #tpu.memory_space<vmem>>, vector<8x128xf32>,
    %c0_i32_7 = arith.constant 0 : i32
    %9 = arith.cmpi eq, %arg1, %c0_i32_7 : i32
    %10 = arith.extui %9 : i1 to i32
    %c0_i32_8 = arith.constant 0 : i32
    %11 = arith.cmpi ne, %10, %c0_i32_8 : i32
    scf.if %11 {
      %c0_9 = arith.constant 0 : index
      %c0_10 = arith.constant 0 : index
      %12 = vector.load %arg11[%c0_9, %c0_10] : memref<8x128xf32, #tpu.memory_space<vmem>>, vector<8x128xf32>
      %c0_11 = arith.constant 0 : index
      %c0_12 = arith.constant 0 : index
      %13 = vector.load %arg3[%c0_11, %c0_12] : memref<8x1xf32, #tpu.memory_space<vmem>>, vector<8x1xf32>
      %14 = vector.broadcast %13 : vector<8x1xf32> to vector<8x128xf32>
      %15 = arith.mulf %12, %14 : vector<8x128xf32>
      %c0_13 = arith.constant 0 : index
      %c0_14 = arith.constant 0 : index
      %16 = vector.load %arg4[%c0_13, %c0_14] : memref<128x128xf32, #tpu.memory_space<vmem>>, vector<128x128xf32>
      %cst_15 = arith.constant dense<0.000000e+00> : vector<8x128xf32>
      %17 = tpu.matmul %15, %16, %cst_15 {dimension_numbers = #tpu.dot_dimension_numbers<[1], [0], [0], [1], [0, 0, 1, 1], [], []>} : vector<8x128xf32>, vector<128x128xf32>, vector<8x128xf32> -> vector<8x128xf32>
      %c0_16 = arith.constant 0 : index
      %c0_17 = arith.constant 0 : index
      %18 = vector.load %arg5[%c0_16, %c0_17] : memref<1x128xf32, #tpu.memory_space<vmem>>, vector<1x128xf32>
      %19 = vector.broadcast %18 : vector<1x128xf32> to vector<8x128xf32>
      %20 = arith.addf %17, %19 : vector<8x128xf32>
      %21 = math.tanh %20 : vector<8x128xf32>
      %c0_18 = arith.constant 0 : index
      %c0_19 = arith.constant 0 : index
      %22 = vector.load %arg6[%c0_18, %c0_19] : memref<128x128xf32, #tpu.memory_space<vmem>>, vector<128x128xf32>
      %cst_20 = arith.constant dense<0.000000e+00> : vector<8x128xf32>
      %23 = tpu.matmul %21, %22, %cst_20 {dimension_numbers = #tpu.dot_dimension_numbers<[1], [0], [0], [1], [0, 0, 1, 1], [], []>} : vector<8x128xf32>, vector<128x128xf32>, vector<8x128xf32> -> vector<8x128xf32>
      %c0_21 = arith.constant 0 : index
      %c0_22 = arith.constant 0 : index
      %24 = vector.load %arg7[%c0_21, %c0_22] : memref<1x128xf32, #tpu.memory_space<vmem>>, vector<1x128xf32>
      %25 = vector.broadcast %24 : vector<1x128xf32> to vector<8x128xf32>
      %26 = arith.addf %23, %25 : vector<8x128xf32>
      %27 = math.tanh %26 : vector<8x128xf32>
      %c0_23 = arith.constant 0 : index
      %c0_24 = arith.constant 0 : index
      %28 = vector.load %arg8[%c0_23, %c0_24] : memref<128x128xf32, #tpu.memory_space<vmem>>, vector<128x128xf32>
      %cst_25 = arith.constant dense<0.000000e+00> : vector<8x128xf32>
      %29 = tpu.matmul %27, %28, %cst_25 {dimension_numbers = #tpu.dot_dimension_numbers<[1], [0], [0], [1], [0, 0, 1, 1], [], []>} : vector<8x128xf32>, vector<128x128xf32>, vector<8x128xf32> -> vector<8x128xf32>
      %c0_26 = arith.constant 0 : index
      %c0_27 = arith.constant 0 : index
      %30 = vector.load %arg9[%c0_26, %c0_27] : memref<1x128xf32, #tpu.memory_space<vmem>>, vector<1x128xf32>
      %31 = vector.broadcast %30 : vector<1x128xf32> to vector<8x128xf32>
      %32 = arith.addf %29, %31 : vector<8x128xf32>
      %33 = math.tanh %32 : vector<8x128xf32>
      %c0_28 = arith.constant 0 : index
      %c0_29 = arith.constant 0 : index
      %34 = vector.load %arg10[%c0_28, %c0_29] : memref<8x128xf32, #tpu.memory_space<vmem>>, vector<8x128xf32>
      tpu.vector_store %arg10[%c0_28, %c0_29], %33 {strides = array<i32>} : memref<8x128xf32, #tpu.memory_space<vmem>>, vector<8x128xf32>,
    } else {
    }
    return
  }
  func.func @transform_0(%arg0: i32, %arg1: i32) -> (i32, i32, i32) {
    %c0_i32 = arith.constant 0 : i32
    %c0_i32_0 = arith.constant 0 : i32
    return %arg0, %arg1, %c0_i32 : i32, i32, i32
  }
  func.func @transform_1(%arg0: i32, %arg1: i32) -> (i32, i32) {
    %c0_i32 = arith.constant 0 : i32
    %c0_i32_0 = arith.constant 0 : i32
    return %arg0, %c0_i32 : i32, i32
  }
  func.func @transform_2(%arg0: i32, %arg1: i32) -> (i32, i32) {
    %c0_i32 = arith.constant 0 : i32
    %c0_i32_0 = arith.constant 0 : i32
    %c0_i32_1 = arith.constant 0 : i32
    return %c0_i32, %c0_i32_0 : i32, i32
  }
  func.func @transform_3(%arg0: i32, %arg1: i32) -> (i32, i32) {
    %c0_i32 = arith.constant 0 : i32
    %c0_i32_0 = arith.constant 0 : i32
    %c0_i32_1 = arith.constant 0 : i32
    return %c0_i32, %c0_i32_0 : i32, i32
  }
  func.func @transform_4(%arg0: i32, %arg1: i32) -> (i32, i32) {
    %c0_i32 = arith.constant 0 : i32
    %c0_i32_0 = arith.constant 0 : i32
    %c0_i32_1 = arith.constant 0 : i32
    return %c0_i32, %c0_i32_0 : i32, i32
  }
  func.func @transform_5(%arg0: i32, %arg1: i32) -> (i32, i32) {
    %c0_i32 = arith.constant 0 : i32
    %c0_i32_0 = arith.constant 0 : i32
    %c0_i32_1 = arith.constant 0 : i32
    return %c0_i32, %c0_i32_0 : i32, i32
  }
  func.func @transform_6(%arg0: i32, %arg1: i32) -> (i32, i32) {
    %c0_i32 = arith.constant 0 : i32
    %c0_i32_0 = arith.constant 0 : i32
    %c0_i32_1 = arith.constant 0 : i32
    return %c0_i32, %c0_i32_0 : i32, i32
  }
  func.func @transform_7(%arg0: i32, %arg1: i32) -> (i32, i32) {
    %c0_i32 = arith.constant 0 : i32
    %c0_i32_0 = arith.constant 0 : i32
    %c0_i32_1 = arith.constant 0 : i32
    return %c0_i32, %c0_i32_0 : i32, i32
  }
  func.func @transform_8(%arg0: i32, %arg1: i32) -> (i32, i32) {
    %c0_i32 = arith.constant 0 : i32
    %c0_i32_0 = arith.constant 0 : i32
    return %arg0, %c0_i32 : i32, i32
  }
}

</mosaic_0001>

<llo_original>
// kernel: dan_model_forward.2
$region0: #{dan_model_forward.2}
  #allocation0 [shape = 'u32[]', space=smem, size = 0x4, offset = 0x4, fixed_abs, tag = 'smem constant byte address 0x4 - core index']
  #allocation1 [shape = 'u32[144,128]{1,0:T(1,128)}', space=vmem, size = 0x12000, scoped, tag = 'internal scratch']
  #allocation2 [shape = 'f32[8,128]{1,0:T(8,128)}', space=vmem, size = 0x1000, scoped, tag = 'scratch operand']
  %s0 = inlined_call_operand.vmem [shape: bf16[8,8,128], index: 0, kind: input, shape index: {}]
  %s1 = inlined_call_operand.vmem [shape: f32[8,1], index: 1, kind: input, shape index: {}]
  %s2 = inlined_call_operand.vmem [shape: f32[128,128], index: 2, kind: input, shape index: {}]
  %s3 = inlined_call_operand.vmem [shape: f32[1,128], index: 3, kind: input, shape index: {}]
  %s4 = inlined_call_operand.vmem [shape: f32[128,128], index: 4, kind: input, shape index: {}]
  %s5 = inlined_call_operand.vmem [shape: f32[1,128], index: 5, kind: input, shape index: {}]
  %s6 = inlined_call_operand.vmem [shape: f32[128,128], index: 6, kind: input, shape index: {}]
  %s7 = inlined_call_operand.vmem [shape: f32[1,128], index: 7, kind: input, shape index: {}]
  %s8 = inlined_call_operand.vmem [shape: f32[8,128], index: 8, kind: output, shape index: {}]
  %s9 = sld [smem:[#allocation0]]
  $region50: #{dan_model_forward.2} parent=0
    _
  %s11 = ssub.s32 1, %s9
  %s12 = scalar_select 0, %s11, %s9
  // Predicated region
  $region2: #{dan_model_forward.2} parent=0 // pred_check
    _
  $region3: #{dan_model_forward.2} parent=0 // pred_check_branch
    %14 = sbr.rel (0) target = $region5
  $region4: #{dan_model_forward.2} parent=0 // pred_region
    _
  $region5: #{dan_model_forward.2} parent=0 // pred_fallthru
    _
  // Predicated region
  $region6: #{dan_model_forward.2} parent=0 // pred_check
    _
  $region7: #{dan_model_forward.2} parent=0 // pred_check_branch
    %16 = sbr.rel (0) target = $region9
  $region8: #{dan_model_forward.2} parent=0 // pred_region
    _
  $region9: #{dan_model_forward.2} parent=0 // pred_fallthru
    _
  // Predicated region
  $region10: #{dan_model_forward.2} parent=0 // pred_check
    _
  $region11: #{dan_model_forward.2} parent=0 // pred_check_branch
    %18 = sbr.rel (0) target = $region13
  $region12: #{dan_model_forward.2} parent=0 // pred_region
    _
  $region13: #{dan_model_forward.2} parent=0 // pred_fallthru
    _
  // Predicated region
  $region14: #{dan_model_forward.2} parent=0 // pred_check
    _
  $region15: #{dan_model_forward.2} parent=0 // pred_check_branch
    %20 = sbr.rel (0) target = $region17
  $region16: #{dan_model_forward.2} parent=0 // pred_region
    _
  $region17: #{dan_model_forward.2} parent=0 // pred_fallthru
    _
  // Predicated region
  $region18: #{dan_model_forward.2} parent=0 // pred_check
    _
  $region19: #{dan_model_forward.2} parent=0 // pred_check_branch
    %22 = sbr.rel (0) target = $region21
  $region20: #{dan_model_forward.2} parent=0 // pred_region
    _
  $region21: #{dan_model_forward.2} parent=0 // pred_fallthru
    _
  // Predicated region
  $region22: #{dan_model_forward.2} parent=0 // pred_check
    _
  $region23: #{dan_model_forward.2} parent=0 // pred_check_branch
    %24 = sbr.rel (0) target = $region25
  $region24: #{dan_model_forward.2} parent=0 // pred_region
    _
  $region25: #{dan_model_forward.2} parent=0 // pred_fallthru
    _
  // Predicated region
  $region26: #{dan_model_forward.2} parent=0 // pred_check
    _
  $region27: #{dan_model_forward.2} parent=0 // pred_check_branch
    %26 = sbr.rel (0) target = $region29
  $region28: #{dan_model_forward.2} parent=0 // pred_region
    _
  $region29: #{dan_model_forward.2} parent=0 // pred_fallthru
    _
  // Predicated region
  $region30: #{dan_model_forward.2} parent=0 // pred_check
    _
  $region31: #{dan_model_forward.2} parent=0 // pred_check_branch
    %28 = sbr.rel (0) target = $region33
  $region32: #{dan_model_forward.2} parent=0 // pred_region
    _
  $region33: #{dan_model_forward.2} parent=0 // pred_fallthru
    _
  %p29 = scmp.eq.s32.totalorder 0, 0
  // Predicated region
  $region34: #{dan_model_forward.2} parent=0 // pred_check
    %p30 = pneg %p29
  $region35: #{dan_model_forward.2} parent=0 // pred_check_branch
    %32 = sbr.rel (%p30) target = $region37
  $region36: #{dan_model_forward.2} parent=0 // pred_region
    %33 = vst [vmem:[#allocation2] sm:$0xff] 0.0
  $region37: #{dan_model_forward.2} parent=0 // pred_fallthru
    _
  %v34 = vld [vmem:[#allocation2] sm:$0xff]
  %v35 = vld [vmem:[%s0] sm:$0xf]
  %v36 = vld [vmem:[%s0 + $0x4] sm:$0xf]
  %v37 = vld [vmem:[%s0 + $0x8] sm:$0xf]
  %v38 = vld [vmem:[%s0 + $0xc] sm:$0xf]
  %v39 = vld [vmem:[%s0 + $0x10] sm:$0xf]
  %v40 = vld [vmem:[%s0 + $0x14] sm:$0xf]
  %v41 = vld [vmem:[%s0 + $0x18] sm:$0xf]
  %v42 = vld [vmem:[%s0 + $0x1c] sm:$0xf]
  %v43 = vunpack.c.l.bf16 %v35
  %v44 = vunpack.c.l.bf16 %v36
  %v45 = vunpack.c.l.bf16 %v37
  %v46 = vunpack.c.l.bf16 %v38
  %v47 = vunpack.c.l.bf16 %v39
  %v48 = vunpack.c.l.bf16 %v40
  %v49 = vunpack.c.l.bf16 %v41
  %v50 = vunpack.c.l.bf16 %v42
  %v51 = vrot.slane %v43, 4
  %v52 = vadd.f32 %v43, %v51
  %v53 = vrot.slane %v52, 2
  %v54 = vadd.f32 %v52, %v53
  %v55 = vrot.slane %v54, 1
  %v56 = vadd.f32 %v54, %v55
  %v57 = vrot.slane %v44, 4
  %v58 = vadd.f32 %v44, %v57
  %v59 = vrot.slane %v58, 2
  %v60 = vadd.f32 %v58, %v59
  %v61 = vrot.slane %v60, 1
  %v62 = vadd.f32 %v60, %v61
  %v63 = vrot.slane %v45, 4
  %v64 = vadd.f32 %v45, %v63
  %v65 = vrot.slane %v64, 2
  %v66 = vadd.f32 %v64, %v65
  %v67 = vrot.slane %v66, 1
  %v68 = vadd.f32 %v66, %v67
  %v69 = vrot.slane %v46, 4
  %v70 = vadd.f32 %v46, %v69
  %v71 = vrot.slane %v70, 2
  %v72 = vadd.f32 %v70, %v71
  %v73 = vrot.slane %v72, 1
  %v74 = vadd.f32 %v72, %v73
  %v75 = vrot.slane %v47, 4
  %v76 = vadd.f32 %v47, %v75
  %v77 = vrot.slane %v76, 2
  %v78 = vadd.f32 %v76, %v77
  %v79 = vrot.slane %v78, 1
  %v80 = vadd.f32 %v78, %v79
  %v81 = vrot.slane %v48, 4
  %v82 = vadd.f32 %v48, %v81
  %v83 = vrot.slane %v82, 2
  %v84 = vadd.f32 %v82, %v83
  %v85 = vrot.slane %v84, 1
  %v86 = vadd.f32 %v84, %v85
  %v87 = vrot.slane %v49, 4
  %v88 = vadd.f32 %v49, %v87
  %v89 = vrot.slane %v88, 2
  %v90 = vadd.f32 %v88, %v89
  %v91 = vrot.slane %v90, 1
  %v92 = vadd.f32 %v90, %v91
  %v93 = vrot.slane %v50, 4
  %v94 = vadd.f32 %v50, %v93
  %v95 = vrot.slane %v94, 2
  %v96 = vadd.f32 %v94, %v95
  %v97 = vrot.slane %v96, 1
  %v98 = vadd.f32 %v96, %v97
  %vm107 = vcmask 1041409
  %v108 = vsel %vm107, %v62, %v56
  %vm109 = vcmask 1042434
  %v110 = vsel %vm109, %v68, %v108
  %vm111 = vcmask 1043459
  %v112 = vsel %vm111, %v74, %v110
  %vm113 = vcmask 1044484
  %v114 = vsel %vm113, %v80, %v112
  %vm115 = vcmask 1045509
  %v116 = vsel %vm115, %v86, %v114
  %vm117 = vcmask 1046534
  %v118 = vsel %vm117, %v92, %v116
  %vm119 = vcmask 1047559
  %v120 = vsel %vm119, %v98, %v118
  %v122 = vadd.f32 %v34, %v120
  %123 = vst [vmem:[#allocation2] sm:$0xff] %v122
  // Predicated region
  $region38: #{dan_model_forward.2} parent=0 // pred_check
    %p124 = pneg %p29
  $region39: #{dan_model_forward.2} parent=0 // pred_check_branch
    %126 = sbr.rel (%p124) target = $region41
  $region40: #{dan_model_forward.2} parent=0 // pred_region
    %v127 = vld [vmem:[#allocation2] sm:$0xff]
    %v128 = vld [vmem:[%s1] sm:$0xff]
    %130 = vset.pattern.permute.xlu0 0
    %131 = vperm.xlu0 %130, %v128
    %v132 = vpop.permute.xlu0 %131
    %v134 = vmul.f32 %v127, %v132
    %v135 = vld [vmem:[%s2] sm:$0xff]
    %v136 = vld [vmem:[%s2 + $0x8] sm:$0xff]
    %v137 = vld [vmem:[%s2 + $0x10] sm:$0xff]
    %v138 = vld [vmem:[%s2 + $0x18] sm:$0xff]
    %v139 = vld [vmem:[%s2 + $0x20] sm:$0xff]
    %v140 = vld [vmem:[%s2 + $0x28] sm:$0xff]
    %v141 = vld [vmem:[%s2 + $0x30] sm:$0xff]
    %v142 = vld [vmem:[%s2 + $0x38] sm:$0xff]
    %v143 = vld [vmem:[%s2 + $0x40] sm:$0xff]
    %v144 = vld [vmem:[%s2 + $0x48] sm:$0xff]
    %v145 = vld [vmem:[%s2 + $0x50] sm:$0xff]
    %v146 = vld [vmem:[%s2 + $0x58] sm:$0xff]
    %v147 = vld [vmem:[%s2 + $0x60] sm:$0xff]
    %v148 = vld [vmem:[%s2 + $0x68] sm:$0xff]
    %v149 = vld [vmem:[%s2 + $0x70] sm:$0xff]
    %v150 = vld [vmem:[%s2 + $0x78] sm:$0xff]
    %v151 = vld [vmem:[%s3] sm:$0x1]
    %v153 = vlaneseq
    %v154 = vshrl.u32 %v153, 7
    %v155 = vsub.s32 0, %v154
    %v156 = vrot.slane %v151, %v155
    %158 = vmatprep.subr.mxu0 0.0
    %159 = vmatpush1.msra.mxu0 %v135
    %160 = vmatprep.subr.mxu0 0.0
    %161 = vmatpush1.msra.mxu0 %v136
    %162 = vmatprep.subr.mxu0 0.0
    %163 = vmatpush1.msra.mxu0 %v137
    %164 = vmatprep.subr.mxu0 0.0
    %165 = vmatpush1.msra.mxu0 %v138
    %166 = vmatprep.subr.mxu0 0.0
    %167 = vmatpush1.msra.mxu0 %v139
    %168 = vmatprep.subr.mxu0 0.0
    %169 = vmatpush1.msra.mxu0 %v140
    %170 = vmatprep.subr.mxu0 0.0
    %171 = vmatpush1.msra.mxu0 %v141
    %172 = vmatprep.subr.mxu0 0.0
    %173 = vmatpush1.msra.mxu0 %v142
    %174 = vmatprep.subr.mxu0 0.0
    %175 = vmatpush1.msra.mxu0 %v143
    %176 = vmatprep.subr.mxu0 0.0
    %177 = vmatpush1.msra.mxu0 %v144
    %178 = vmatprep.subr.mxu0 0.0
    %179 = vmatpush1.msra.mxu0 %v145
    %180 = vmatprep.subr.mxu0 0.0
    %181 = vmatpush1.msra.mxu0 %v146
    %182 = vmatprep.subr.mxu0 0.0
    %183 = vmatpush1.msra.mxu0 %v147
    %184 = vmatprep.subr.mxu0 0.0
    %185 = vmatpush1.msra.mxu0 %v148
    %186 = vmatprep.subr.mxu0 0.0
    %187 = vmatpush1.msra.mxu0 %v149
    %188 = vmatprep.subr.mxu0 0.0
    %189 = vmatpush1.msra.mxu0 %v150
    %190 = vmatprep.subr.mxu0 0.0
    %191 = vmatpush1.msra.mxu0 0.0
    %192 = vmatprep.subr.mxu0 0.0
    %193 = vmatpush1.msra.mxu0 0.0
    %194 = vmatprep.subr.mxu0 0.0
    %195 = vmatpush1.msra.mxu0 0.0
    %196 = vmatprep.subr.mxu0 0.0
    %197 = vmatpush1.msra.mxu0 0.0
    %198 = vmatprep.subr.mxu0 0.0
    %199 = vmatpush1.msra.mxu0 0.0
    %200 = vmatprep.subr.mxu0 0.0
    %201 = vmatpush1.msra.mxu0 0.0
    %202 = vmatprep.subr.mxu0 0.0
    %203 = vmatpush1.msra.mxu0 0.0
    %204 = vmatprep.subr.mxu0 0.0
    %205 = vmatpush1.msra.mxu0 0.0
    %206 = vmatprep.subr.mxu0 0.0
    %207 = vmatpush1.msra.mxu0 0.0
    %208 = vmatprep.subr.mxu0 0.0
    %209 = vmatpush1.msra.mxu0 0.0
    %210 = vmatprep.subr.mxu0 0.0
    %211 = vmatpush1.msra.mxu0 0.0
    %212 = vmatprep.subr.mxu0 0.0
    %213 = vmatpush1.msra.mxu0 0.0
    %214 = vmatprep.subr.mxu0 0.0
    %215 = vmatpush1.msra.mxu0 0.0
    %216 = vmatprep.subr.mxu0 0.0
    %217 = vmatpush1.msra.mxu0 0.0
    %218 = vmatprep.subr.mxu0 0.0
    %219 = vmatpush1.msra.mxu0 0.0
    %220 = vmatprep.subr.mxu0 0.0
    %221 = vmatpush1.msra.mxu0 0.0
    %222 = vmatprep.mubr.f32.mxu0 0.0
    %223 = vmatmul.mubr.f32.gmra.mrb[0].mxu0 %v134
    %v224 = vpop.f32.mrb[0].mxu0
    %v225 = vadd.f32 %v156, %v224
    %v226 = vpop.f32.mrb[0].mxu0
    %227 = vdwg.mxu0
    %v228 = vtanh.pop %v225
    %v229 = vld [vmem:[%s4] sm:$0xff]
    %v230 = vld [vmem:[%s4 + $0x8] sm:$0xff]
    %v231 = vld [vmem:[%s4 + $0x10] sm:$0xff]
    %v232 = vld [vmem:[%s4 + $0x18] sm:$0xff]
    %v233 = vld [vmem:[%s4 + $0x20] sm:$0xff]
    %v234 = vld [vmem:[%s4 + $0x28] sm:$0xff]
    %v235 = vld [vmem:[%s4 + $0x30] sm:$0xff]
    %v236 = vld [vmem:[%s4 + $0x38] sm:$0xff]
    %v237 = vld [vmem:[%s4 + $0x40] sm:$0xff]
    %v238 = vld [vmem:[%s4 + $0x48] sm:$0xff]
    %v239 = vld [vmem:[%s4 + $0x50] sm:$0xff]
    %v240 = vld [vmem:[%s4 + $0x58] sm:$0xff]
    %v241 = vld [vmem:[%s4 + $0x60] sm:$0xff]
    %v242 = vld [vmem:[%s4 + $0x68] sm:$0xff]
    %v243 = vld [vmem:[%s4 + $0x70] sm:$0xff]
    %v244 = vld [vmem:[%s4 + $0x78] sm:$0xff]
    %v245 = vld [vmem:[%s5] sm:$0x1]
    %v247 = vlaneseq
    %v248 = vshrl.u32 %v247, 7
    %v249 = vsub.s32 0, %v248
    %v250 = vrot.slane %v245, %v249
    %252 = vmatprep.subr.mxu0 0.0
    %253 = vmatpush1.msra.mxu0 %v229
    %254 = vmatprep.subr.mxu0 0.0
    %255 = vmatpush1.msra.mxu0 %v230
    %256 = vmatprep.subr.mxu0 0.0
    %257 = vmatpush1.msra.mxu0 %v231
    %258 = vmatprep.subr.mxu0 0.0
    %259 = vmatpush1.msra.mxu0 %v232
    %260 = vmatprep.subr.mxu0 0.0
    %261 = vmatpush1.msra.mxu0 %v233
    %262 = vmatprep.subr.mxu0 0.0
    %263 = vmatpush1.msra.mxu0 %v234
    %264 = vmatprep.subr.mxu0 0.0
    %265 = vmatpush1.msra.mxu0 %v235
    %266 = vmatprep.subr.mxu0 0.0
    %267 = vmatpush1.msra.mxu0 %v236
    %268 = vmatprep.subr.mxu0 0.0
    %269 = vmatpush1.msra.mxu0 %v237
    %270 = vmatprep.subr.mxu0 0.0
    %271 = vmatpush1.msra.mxu0 %v238
    %272 = vmatprep.subr.mxu0 0.0
    %273 = vmatpush1.msra.mxu0 %v239
    %274 = vmatprep.subr.mxu0 0.0
    %275 = vmatpush1.msra.mxu0 %v240
    %276 = vmatprep.subr.mxu0 0.0
    %277 = vmatpush1.msra.mxu0 %v241
    %278 = vmatprep.subr.mxu0 0.0
    %279 = vmatpush1.msra.mxu0 %v242
    %280 = vmatprep.subr.mxu0 0.0
    %281 = vmatpush1.msra.mxu0 %v243
    %282 = vmatprep.subr.mxu0 0.0
    %283 = vmatpush1.msra.mxu0 %v244
    %284 = vmatprep.subr.mxu0 0.0
    %285 = vmatpush1.msra.mxu0 0.0
    %286 = vmatprep.subr.mxu0 0.0
    %287 = vmatpush1.msra.mxu0 0.0
    %288 = vmatprep.subr.mxu0 0.0
    %289 = vmatpush1.msra.mxu0 0.0
    %290 = vmatprep.subr.mxu0 0.0
    %291 = vmatpush1.msra.mxu0 0.0
    %292 = vmatprep.subr.mxu0 0.0
    %293 = vmatpush1.msra.mxu0 0.0
    %294 = vmatprep.subr.mxu0 0.0
    %295 = vmatpush1.msra.mxu0 0.0
    %296 = vmatprep.subr.mxu0 0.0
    %297 = vmatpush1.msra.mxu0 0.0
    %298 = vmatprep.subr.mxu0 0.0
    %299 = vmatpush1.msra.mxu0 0.0
    %300 = vmatprep.subr.mxu0 0.0
    %301 = vmatpush1.msra.mxu0 0.0
    %302 = vmatprep.subr.mxu0 0.0
    %303 = vmatpush1.msra.mxu0 0.0
    %304 = vmatprep.subr.mxu0 0.0
    %305 = vmatpush1.msra.mxu0 0.0
    %306 = vmatprep.subr.mxu0 0.0
    %307 = vmatpush1.msra.mxu0 0.0
    %308 = vmatprep.subr.mxu0 0.0
    %309 = vmatpush1.msra.mxu0 0.0
    %310 = vmatprep.subr.mxu0 0.0
    %311 = vmatpush1.msra.mxu0 0.0
    %312 = vmatprep.subr.mxu0 0.0
    %313 = vmatpush1.msra.mxu0 0.0
    %314 = vmatprep.subr.mxu0 0.0
    %315 = vmatpush1.msra.mxu0 0.0
    %316 = vmatprep.mubr.f32.mxu0 0.0
    %317 = vmatmul.mubr.f32.gmra.mrb[0].mxu0 %v228
    %v318 = vpop.f32.mrb[0].mxu0
    %v319 = vadd.f32 %v250, %v318
    %v320 = vpop.f32.mrb[0].mxu0
    %321 = vdwg.mxu0
    %v322 = vtanh.pop %v319
    %v323 = vld [vmem:[%s6] sm:$0xff]
    %v324 = vld [vmem:[%s6 + $0x8] sm:$0xff]
    %v325 = vld [vmem:[%s6 + $0x10] sm:$0xff]
    %v326 = vld [vmem:[%s6 + $0x18] sm:$0xff]
    %v327 = vld [vmem:[%s6 + $0x20] sm:$0xff]
    %v328 = vld [vmem:[%s6 + $0x28] sm:$0xff]
    %v329 = vld [vmem:[%s6 + $0x30] sm:$0xff]
    %v330 = vld [vmem:[%s6 + $0x38] sm:$0xff]
    %v331 = vld [vmem:[%s6 + $0x40] sm:$0xff]
    %v332 = vld [vmem:[%s6 + $0x48] sm:$0xff]
    %v333 = vld [vmem:[%s6 + $0x50] sm:$0xff]
    %v334 = vld [vmem:[%s6 + $0x58] sm:$0xff]
    %v335 = vld [vmem:[%s6 + $0x60] sm:$0xff]
    %v336 = vld [vmem:[%s6 + $0x68] sm:$0xff]
    %v337 = vld [vmem:[%s6 + $0x70] sm:$0xff]
    %v338 = vld [vmem:[%s6 + $0x78] sm:$0xff]
    %v339 = vld [vmem:[%s7] sm:$0x1]
    %v341 = vlaneseq
    %v342 = vshrl.u32 %v341, 7
    %v343 = vsub.s32 0, %v342
    %v344 = vrot.slane %v339, %v343
    %346 = vmatprep.subr.mxu0 0.0
    %347 = vmatpush1.msra.mxu0 %v323
    %348 = vmatprep.subr.mxu0 0.0
    %349 = vmatpush1.msra.mxu0 %v324
    %350 = vmatprep.subr.mxu0 0.0
    %351 = vmatpush1.msra.mxu0 %v325
    %352 = vmatprep.subr.mxu0 0.0
    %353 = vmatpush1.msra.mxu0 %v326
    %354 = vmatprep.subr.mxu0 0.0
    %355 = vmatpush1.msra.mxu0 %v327
    %356 = vmatprep.subr.mxu0 0.0
    %357 = vmatpush1.msra.mxu0 %v328
    %358 = vmatprep.subr.mxu0 0.0
    %359 = vmatpush1.msra.mxu0 %v329
    %360 = vmatprep.subr.mxu0 0.0
    %361 = vmatpush1.msra.mxu0 %v330
    %362 = vmatprep.subr.mxu0 0.0
    %363 = vmatpush1.msra.mxu0 %v331
    %364 = vmatprep.subr.mxu0 0.0
    %365 = vmatpush1.msra.mxu0 %v332
    %366 = vmatprep.subr.mxu0 0.0
    %367 = vmatpush1.msra.mxu0 %v333
    %368 = vmatprep.subr.mxu0 0.0
    %369 = vmatpush1.msra.mxu0 %v334
    %370 = vmatprep.subr.mxu0 0.0
    %371 = vmatpush1.msra.mxu0 %v335
    %372 = vmatprep.subr.mxu0 0.0
    %373 = vmatpush1.msra.mxu0 %v336
    %374 = vmatprep.subr.mxu0 0.0
    %375 = vmatpush1.msra.mxu0 %v337
    %376 = vmatprep.subr.mxu0 0.0
    %377 = vmatpush1.msra.mxu0 %v338
    %378 = vmatprep.subr.mxu0 0.0
    %379 = vmatpush1.msra.mxu0 0.0
    %380 = vmatprep.subr.mxu0 0.0
    %381 = vmatpush1.msra.mxu0 0.0
    %382 = vmatprep.subr.mxu0 0.0
    %383 = vmatpush1.msra.mxu0 0.0
    %384 = vmatprep.subr.mxu0 0.0
    %385 = vmatpush1.msra.mxu0 0.0
    %386 = vmatprep.subr.mxu0 0.0
    %387 = vmatpush1.msra.mxu0 0.0
    %388 = vmatprep.subr.mxu0 0.0
    %389 = vmatpush1.msra.mxu0 0.0
    %390 = vmatprep.subr.mxu0 0.0
    %391 = vmatpush1.msra.mxu0 0.0
    %392 = vmatprep.subr.mxu0 0.0
    %393 = vmatpush1.msra.mxu0 0.0
    %394 = vmatprep.subr.mxu0 0.0
    %395 = vmatpush1.msra.mxu0 0.0
    %396 = vmatprep.subr.mxu0 0.0
    %397 = vmatpush1.msra.mxu0 0.0
    %398 = vmatprep.subr.mxu0 0.0
    %399 = vmatpush1.msra.mxu0 0.0
    %400 = vmatprep.subr.mxu0 0.0
    %401 = vmatpush1.msra.mxu0 0.0
    %402 = vmatprep.subr.mxu0 0.0
    %403 = vmatpush1.msra.mxu0 0.0
    %404 = vmatprep.subr.mxu0 0.0
    %405 = vmatpush1.msra.mxu0 0.0
    %406 = vmatprep.subr.mxu0 0.0
    %407 = vmatpush1.msra.mxu0 0.0
    %408 = vmatprep.subr.mxu0 0.0
    %409 = vmatpush1.msra.mxu0 0.0
    %410 = vmatprep.mubr.f32.mxu0 0.0
    %411 = vmatmul.mubr.f32.gmra.mrb[0].mxu0 %v322
    %v412 = vpop.f32.mrb[0].mxu0
    %v413 = vadd.f32 %v344, %v412
    %v414 = vpop.f32.mrb[0].mxu0
    %415 = vdwg.mxu0
    %v416 = vtanh.pop %v413
    %417 = vst [vmem:[%s8] sm:$0xff] %v416
  $region41: #{dan_model_forward.2} parent=0 // pred_fallthru
    _
  // Predicated region
  $region42: #{dan_model_forward.2} parent=0 // pred_check
    _
  $region43: #{dan_model_forward.2} parent=0 // pred_check_branch
    %419 = sbr.rel (0) target = $region45
  $region44: #{dan_model_forward.2} parent=0 // pred_region
    _
  $region45: #{dan_model_forward.2} parent=0 // pred_fallthru
    _
  // Predicated region
  $region46: #{dan_model_forward.2} parent=0 // pred_check
    _
  $region47: #{dan_model_forward.2} parent=0 // pred_check_branch
    %421 = sbr.rel (0) target = $region49
  $region48: #{dan_model_forward.2} parent=0 // pred_region
    _
  $region49: #{dan_model_forward.2} parent=0 // pred_fallthru
    _

</llo_original>
